<compile_context>
chip_gen: v6e
topology: v6e:2x2x1
jax: 0.10.0
libtpu: 0.0.40
codegen_flags: <defaults>
</compile_context>

<pallas_src>
import functools

import jax
import jax.numpy as jnp
from jax.experimental import pallas as pl
from jax.experimental.pallas import tpu as pltpu


def _shared_mlp_kernel(x_ref, w_ref, sh_ref, o_ref, *, apply_relu):
    """One (spatial-tile, batch) grid step.

    x_ref  : (C_in,  TM)   channels-first spatial tile (lane axis = spatial)
    w_ref  : (C_out, C_in) conv weight with BN scale folded in
    sh_ref : (C_out, 1)    conv bias + BN shift, folded
    o_ref  : (C_out, TM)
    """
    y = jnp.dot(w_ref[...], x_ref[...], preferred_element_type=jnp.float32)
    y = y + sh_ref[...]
    if apply_relu:
        y = jnp.maximum(y, 0.0)
    o_ref[...] = y.astype(o_ref.dtype)


def _round_up(v, k):
    return (v + k - 1) // k * k


def _choose_tile(m, c_in, c_out, batch, *, tile_budget_bytes=24 * 1024 * 1024):
    """Pick the spatial tile TM and a safe vmem_limit_bytes.

    VMEM accounting per spatial column (f32, sublane-padded channels):
      2 double-buffered x tiles:   2 * rup(c_in, 8)  * 4
      2 double-buffered out tiles: 2 * rup(c_out, 8) * 4
      f32 compute intermediate:    1 * rup(c_out, 8) * 4
    The hard cap of 32768 columns amortizes the ~0.35 us/step overhead to
    <~12% on every generation while the working set (~16 MiB at these channel
    widths) stays well inside an explicit 24-48 MiB scoped-VMEM limit, which
    is safe on v5e (128 MiB phys), v6e (128 MiB) and v7x (64 MiB).
    """
    c_in_p = _round_up(c_in, 8)
    c_out_p = _round_up(c_out, 8)
    per_col = (2 * c_in_p + 3 * c_out_p) * 4

    if m <= 128:
        tm = m                      # full-extent block; no 128-divisibility needed
    else:
        tm = (tile_budget_bytes // per_col) // 128 * 128
        tm = max(128, min(32768, tm))
        # Never exceed the 128-aligned spatial extent (block stays <= array).
        tm = min(tm, (m // 128) * 128)
        # v7x megacore: the spatial axis is the leading "parallel" one; make
        # sure it has >= 2 tiles when the batch axis cannot provide parallelism.
        if batch == 1:
            tm = min(tm, max(128, _round_up((m + 1) // 2, 128)))

    need = per_col * tm + 256 * 1024          # + weights/shift/epsilon scratch
    vmem_limit = int(min(48 * 1024 * 1024, max(24 * 1024 * 1024, 2 * need)))
    return tm, vmem_limit


def shared_mlp(x, w_eff, shift_eff, *, activation="relu"):
    """Pallas-backed SharedMLP.forward (1x1 conv [+ folded BN] [+ activation]).

    x         : (B, C_in, H, W) float32 (NCHW, matching the PyTorch module)
    w_eff     : (C_out, C_in)   conv weight with BN scale folded in
    shift_eff : (C_out,)        conv bias with BN shift folded in
    returns   : (B, C_out, H, W) in x.dtype
    """
    B, C_in, H, W = x.shape
    C_out = w_eff.shape[0]
    M = H * W

    TM, vmem_limit = _choose_tile(M, C_in, C_out, B)
    num_m = pl.cdiv(M, TM)

    x_flat = x.reshape(B, C_in, M)              # free reshape (contiguous NCHW)

    kernel = functools.partial(_shared_mlp_kernel,
                               apply_relu=(activation == "relu"))

    grid_spec = pltpu.PrefetchScalarGridSpec(
        num_scalar_prefetch=0,
        grid=(num_m, B),                        # spatial leads -> sharded on v7x
        in_specs=[
            pl.BlockSpec((None, C_in, TM), lambda m, b: (b, 0, m)),
            pl.BlockSpec((C_out, C_in), lambda m, b: (0, 0)),
            pl.BlockSpec((C_out, 1), lambda m, b: (0, 0)),
        ],
        out_specs=pl.BlockSpec((None, C_out, TM), lambda m, b: (b, 0, m)),
    )

    out_flat = pl.pallas_call(
        kernel,
        out_shape=jax.ShapeDtypeStruct((B, C_out, M), x.dtype),
        grid_spec=grid_spec,
        compiler_params=pltpu.CompilerParams(
            dimension_semantics=("parallel", "parallel"),
            vmem_limit_bytes=vmem_limit),
    )(x_flat, w_eff, shift_eff.reshape(C_out, 1))

    return out_flat.reshape(B, C_out, H, W)     # free reshape (contiguous)


def init_params(c_in, c_out, key, *, bn=True, eps=1e-6):
    """Synthetic Conv2d(c_in, c_out, 1) (+ BatchNorm2d(c_out, eps=1e-6)) params.

    Returns raw parameters (for the pure-JAX reference) plus the folded
    (w_eff, shift_eff) pair consumed by the kernel.
    """
    kw, kb, kg, kbt, km, kv = jax.random.split(key, 6)
    w = 0.1 * jax.random.normal(kw, (c_out, c_in), jnp.float32)
    bias = 0.1 * jax.random.normal(kb, (c_out,), jnp.float32)
    p = {"w": w, "bias": bias, "bn": bn, "eps": eps}
    if bn:
        gamma = 1.0 + 0.1 * jax.random.normal(kg, (c_out,), jnp.float32)
        beta = 0.1 * jax.random.normal(kbt, (c_out,), jnp.float32)
        mean = 0.1 * jax.random.normal(km, (c_out,), jnp.float32)
        var = 0.5 + jnp.abs(jax.random.normal(kv, (c_out,), jnp.float32))
        p.update({"gamma": gamma, "beta": beta, "mean": mean, "var": var})
        scale = gamma / jnp.sqrt(var + eps)
        p["w_eff"] = w * scale[:, None]
        p["shift_eff"] = (bias - mean) * scale + beta
    else:
        p["w_eff"] = w
        p["shift_eff"] = bias
    return p


def reference_jax(x, p, *, activation="relu"):
    """Pure-JAX reference mirroring the PyTorch SharedMLP forward (NCHW)."""
    y = jnp.einsum("bchw,oc->bohw", x, p["w"],
                   precision=jax.lax.Precision.HIGHEST)
    y = y + p["bias"][None, :, None, None]
    if p["bn"]:
        scale = p["gamma"] / jnp.sqrt(p["var"] + p["eps"])
        y = (y - p["mean"][None, :, None, None]) * scale[None, :, None, None] \
            + p["beta"][None, :, None, None]
    if activation == "relu":
        y = jnp.maximum(y, 0.0)
    return y


if __name__ == "__main__":
    key = jax.random.PRNGKey(0)
    kx1, kx2, kp1, kp2, kp3 = jax.random.split(key, 5)

    # config 1: conv + BatchNorm(eval) + ReLU.  NCHW (B, C_in, N, K) =
    # (2, 10, 16, 9): H*W = 144 is not a multiple of 128, exercising the
    # masked partial-last-block path (no wrapper pad / slice anymore).
    B, C_in, C_out, H, W = 2, 10, 32, 16, 9
    x = jax.random.normal(kx1, (B, C_in, H, W), jnp.float32)
    p1 = init_params(C_in, C_out, kp1, bn=True, eps=1e-6)
    out1 = jax.block_until_ready(
        shared_mlp(x, p1["w_eff"], p1["shift_eff"], activation="relu"))
    assert out1.shape == (B, C_out, H, W), out1.shape
    ref1 = reference_jax(x, p1, activation="relu")
    assert jnp.allclose(out1, ref1, rtol=1e-4, atol=1e-4), \
        float(jnp.max(jnp.abs(out1 - ref1)))

    # config 2: plain conv (bn=False, no activation), same shapes.
    p2 = init_params(C_in, C_out, kp2, bn=False)
    out2 = jax.block_until_ready(
        shared_mlp(x, p2["w_eff"], p2["shift_eff"], activation=None))
    ref2 = reference_jax(x, p2, activation=None)
    assert jnp.allclose(out2, ref2, rtol=1e-4, atol=1e-4), \
        float(jnp.max(jnp.abs(out2 - ref2)))

    # config 3: batch == 1 (exercises the "spatial axis must keep >= 2 tiles"
    # megacore heuristic), M = 512 a clean multiple of 128.
    B3, C_in3, C_out3, H3, W3 = 1, 8, 16, 32, 16
    x3 = jax.random.normal(kx2, (B3, C_in3, H3, W3), jnp.float32)
    p3 = init_params(C_in3, C_out3, kp3, bn=True, eps=1e-6)
    out3 = jax.block_until_ready(
        shared_mlp(x3, p3["w_eff"], p3["shift_eff"], activation="relu"))
    ref3 = reference_jax(x3, p3, activation="relu")
    assert jnp.allclose(out3, ref3, rtol=1e-4, atol=1e-4), \
        float(jnp.max(jnp.abs(out3 - ref3)))

    print("KERNEL_OK")
</pallas_src>

<mosaic_0001>
module attributes {stable_mosaic.version = 11 : i64} {
  func.func @_shared_mlp_kernel(%arg0: i32, %arg1: i32, %arg2: memref<1x10x128xf32, #tpu.memory_space<vmem>>, %arg3: memref<32x10xf32, #tpu.memory_space<vmem>>, %arg4: memref<32x1xf32, #tpu.memory_space<vmem>>, %arg5: memref<1x32x128xf32, #tpu.memory_space<vmem>>) attributes {dimension_semantics = [#tpu.dimension_semantics<parallel>, #tpu.dimension_semantics<parallel>], iteration_bounds = array<i64: 2, 2>, scalar_prefetch = 0 : i64, scratch_operands = 0 : i64, tpu.core_type = #tpu.core_type<tc>, window_params = [{transform_indices = @transform_0, window_bounds = array<i64: 1, 10, 128>}, {pipeline_mode = #tpu.pipeline_mode<synchronous>, transform_indices = @transform_1, window_bounds = array<i64: 32, 10>}, {pipeline_mode = #tpu.pipeline_mode<synchronous>, transform_indices = @transform_2, window_bounds = array<i64: 32, 1>}, {transform_indices = @transform_3, window_bounds = array<i64: 1, 32, 128>}]} {
    %c0 = arith.constant 0 : index
    %c0_0 = arith.constant 0 : index
    %0 = vector.load %arg3[%c0, %c0_0] : memref<32x10xf32, #tpu.memory_space<vmem>>, vector<32x10xf32>
    %c0_1 = arith.constant 0 : index
    %c0_2 = arith.constant 0 : index
    %c0_3 = arith.constant 0 : index
    %1 = vector.load %arg2[%c0_1, %c0_2, %c0_3] : memref<1x10x128xf32, #tpu.memory_space<vmem>>, vector<1x10x128xf32>
    %2 = vector.shape_cast %1 : vector<1x10x128xf32> to vector<10x128xf32>
    %cst = arith.constant dense<0.000000e+00> : vector<32x128xf32>
    %3 = tpu.matmul %0, %2, %cst {dimension_numbers = #tpu.dot_dimension_numbers<[1], [0], [0], [1], [0, 0, 1, 1], [], []>} : vector<32x10xf32>, vector<10x128xf32>, vector<32x128xf32> -> vector<32x128xf32>
    %c0_4 = arith.constant 0 : index
    %c0_5 = arith.constant 0 : index
    %4 = vector.load %arg4[%c0_4, %c0_5] : memref<32x1xf32, #tpu.memory_space<vmem>>, vector<32x1xf32>
    %5 = vector.broadcast %4 : vector<32x1xf32> to vector<32x128xf32>
    %6 = arith.addf %3, %5 : vector<32x128xf32>
    %cst_6 = arith.constant 0.000000e+00 : f32
    %7 = vector.broadcast %cst_6 : f32 to vector<32x128xf32>
    %8 = arith.maximumf %6, %7 : vector<32x128xf32>
    %c0_7 = arith.constant 0 : index
    %c0_8 = arith.constant 0 : index
    %c0_9 = arith.constant 0 : index
    %9 = vector.load %arg5[%c0_7, %c0_8, %c0_9] : memref<1x32x128xf32, #tpu.memory_space<vmem>>, vector<1x32x128xf32>
    %10 = vector.shape_cast %9 : vector<1x32x128xf32> to vector<32x128xf32>
    %11 = vector.shape_cast %8 : vector<32x128xf32> to vector<1x32x128xf32>
    tpu.vector_store %arg5[%c0_7, %c0_8, %c0_9], %11 {strides = array<i32>} : memref<1x32x128xf32, #tpu.memory_space<vmem>>, vector<1x32x128xf32>,
    return
  }
  func.func @transform_0(%arg0: i32, %arg1: i32) -> (i32, i32, i32) {
    %c0_i32 = arith.constant 0 : i32
    %c0_i32_0 = arith.constant 0 : i32
    return %arg1, %c0_i32, %arg0 : i32, i32, i32
  }
  func.func @transform_1(%arg0: i32, %arg1: i32) -> (i32, i32) {
    %c0_i32 = arith.constant 0 : i32
    %c0_i32_0 = arith.constant 0 : i32
    %c0_i32_1 = arith.constant 0 : i32
    return %c0_i32, %c0_i32_0 : i32, i32
  }
  func.func @transform_2(%arg0: i32, %arg1: i32) -> (i32, i32) {
    %c0_i32 = arith.constant 0 : i32
    %c0_i32_0 = arith.constant 0 : i32
    %c0_i32_1 = arith.constant 0 : i32
    return %c0_i32, %c0_i32_0 : i32, i32
  }
  func.func @transform_3(%arg0: i32, %arg1: i32) -> (i32, i32, i32) {
    %c0_i32 = arith.constant 0 : i32
    %c0_i32_0 = arith.constant 0 : i32
    return %arg1, %c0_i32, %arg0 : i32, i32, i32
  }
}

</mosaic_0001>

<llo_original>
// kernel: tpu_custom_call.1
$region0: #{tpu_custom_call.1}
  #allocation0 [shape = 'u32[]', space=smem, size = 0x4, offset = 0x4, fixed_abs, tag = 'smem constant byte address 0x4 - core index']
  #allocation1 [shape = 'u32[144,128]{1,0:T(1,128)}', space=vmem, size = 0x12000, scoped, tag = 'internal scratch']
  %s0 = inlined_call_operand.vmem [shape: f32[2,10,144], index: 0, kind: input, shape index: {}]
  %s1 = inlined_call_operand.vmem [shape: f32[32,10], index: 1, kind: input, shape index: {}]
  %s2 = inlined_call_operand.vmem [shape: f32[32,1], index: 2, kind: input, shape index: {}]
  %s3 = inlined_call_operand.hbm [shape: f32[2,32,144], index: 3, kind: output, shape index: {}]
  %s4 = sld [smem:[#allocation0]]
  $region83: #{tpu_custom_call.1} parent=0
    _
  %s6 = ssub.s32 1, %s4
  %s7 = scalar_select 0, %s6, %s4
  $region1: #{tpu_custom_call.1} parent=0
    #allocation2 [shape = 'u8[16384]{0}', space=vmem, size = 0x4000, scoped, tag = 'input window, operand 0']
    #allocation3 [shape = 'u8[32768]{0}', space=vmem, size = 0x8000, scoped, tag = 'output window, operand 0']
    #allocation4 [shape = 's32[2]{0}', space=sflag, size = 0x8, scoped, tag = 'scoped memory for tpu_custom_call.1']
    %8 = vsyncpa [#allocation4], 0
    %s9 = scalar_lea.sflag [#allocation4], 1
    %10 = vsyncpa %s9, 0
    loop: start=0, step=1, limit=6
    $region2: #{tpu_custom_call.1} parent=1 // loop_pre_header
      _
    $region3: #{tpu_custom_call.1} parent=1 // loop_header
      %s12 = sphi 0, %s16
      %p13 = scmp.ge.s32.totalorder %s12, 6
      %s19 = sphi 0, %s31
      %s20 = sphi 0, %s27
      %s21 = sphi 0, %s19
      %s22 = sphi 0, %s20
      %s23 = sphi 0, %s21
      %s24 = sphi 0, %s22
      %s36 = sphi 0, %s38
      %s39 = sphi 0, %s36
      %s40 = sphi 0, %s39
      %s56 = sphi 0, %s40
      %s60 = sphi 0, %s60
      %s62 = sphi 0, %s60
      %s63 = sphi 0, %s62
      %s77 = sphi 0, %s63
      %s81 = sphi 0, %s81
      %s83 = sphi 0, %s81
      %s84 = sphi 0, %s83
      %s98 = sphi 0, %s84
      %s106 = sphi 0, %s108
      %s109 = sphi 0, %s106
      %s110 = sphi 0, %s109
      %s126 = sphi 0, %s110
    $region4: #{tpu_custom_call.1} parent=1 // loop_header_branch
      %15 = sbr.rel (%p13) target = $region8
    $region5: #{tpu_custom_call.1} parent=1 // loop_body
      %s17 = ssub.s32 %s12, 1
      %s18 = ssub.s32 %s12, 2
      %s25 = sadd.s32 1, %s20
      %p26 = scmp.ge.s32.totalorder %s25, 2
      %s27 = scalar_select %p26, 0, %s25
      %s28 = sadd.s32 1, %s19
      %s29 = scalar_select %p26, %s28, %s19
      %p30 = scmp.ge.s32.totalorder %s29, 2
      %s31 = scalar_select %p30, 0, %s29
      %s32 = ssub.s32 %s20, %s27
      %s33 = ssub.s32 %s19, %s31
      %s34 = sor.u32 %s32, %s33
      %p35 = scmp.eq.s32.totalorder %s34, 0
      %s37 = sadd.s32 %s36, 1
      %s38 = scalar_select %p35, %s36, %s37
      %p41 = pneg %p35
      %p42 = scmp.eq.s32.totalorder %s12, 3
      %p43 = por %p41, %p42
      %p44 = scmp.ne.s32.totalorder %s36, %s39
      %p45 = scmp.eq.s32.totalorder %s12, 0
      %p46 = por %p44, %p45
      %p47 = scmp.ne.s32.totalorder %s36, %s39
      %p48 = scmp.eq.s32.totalorder %s17, 3
      %p49 = por %p47, %p48
      %p50 = scmp.ne.s32.totalorder %s39, %s40
      %p51 = scmp.eq.s32.totalorder %s17, 0
      %p52 = por %p50, %p51
      %p53 = scmp.ne.s32.totalorder %s39, %s40
      %p54 = scmp.eq.s32.totalorder %s18, 3
      %p55 = por %p53, %p54
      %p57 = scmp.ne.s32.totalorder %s40, %s56
      %p58 = scmp.eq.s32.totalorder %s18, 0
      %p59 = por %p57, %p58
      %s61 = sadd.s32 %s60, 1
      %p64 = scmp.eq.s32.totalorder %s12, 3
      %p65 = scmp.ne.s32.totalorder %s60, %s62
      %p66 = scmp.eq.s32.totalorder %s12, 0
      %p67 = por %p65, %p66
      %p68 = scmp.ne.s32.totalorder %s60, %s62
      %p69 = scmp.eq.s32.totalorder %s17, 3
      %p70 = por %p68, %p69
      %p71 = scmp.ne.s32.totalorder %s62, %s63
      %p72 = scmp.eq.s32.totalorder %s17, 0
      %p73 = por %p71, %p72
      %p74 = scmp.ne.s32.totalorder %s62, %s63
      %p75 = scmp.eq.s32.totalorder %s18, 3
      %p76 = por %p74, %p75
      %p78 = scmp.ne.s32.totalorder %s63, %s77
      %p79 = scmp.eq.s32.totalorder %s18, 0
      %p80 = por %p78, %p79
      %s82 = sadd.s32 %s81, 1
      %p85 = scmp.eq.s32.totalorder %s12, 3
      %p86 = scmp.ne.s32.totalorder %s81, %s83
      %p87 = scmp.eq.s32.totalorder %s12, 0
      %p88 = por %p86, %p87
      %p89 = scmp.ne.s32.totalorder %s81, %s83
      %p90 = scmp.eq.s32.totalorder %s17, 3
      %p91 = por %p89, %p90
      %p92 = scmp.ne.s32.totalorder %s83, %s84
      %p93 = scmp.eq.s32.totalorder %s17, 0
      %p94 = por %p92, %p93
      %p95 = scmp.ne.s32.totalorder %s83, %s84
      %p96 = scmp.eq.s32.totalorder %s18, 3
      %p97 = por %p95, %p96
      %p99 = scmp.ne.s32.totalorder %s84, %s98
      %p100 = scmp.eq.s32.totalorder %s18, 0
      %p101 = por %p99, %p100
      %s102 = ssub.s32 %s20, %s27
      %s103 = ssub.s32 %s19, %s31
      %s104 = sor.u32 %s102, %s103
      %p105 = scmp.eq.s32.totalorder %s104, 0
      %s107 = sadd.s32 %s106, 1
      %s108 = scalar_select %p105, %s106, %s107
      %p111 = pneg %p105
      %p112 = scmp.eq.s32.totalorder %s12, 3
      %p113 = por %p111, %p112
      %p114 = scmp.ne.s32.totalorder %s106, %s109
      %p115 = scmp.eq.s32.totalorder %s12, 0
      %p116 = por %p114, %p115
      %p117 = scmp.ne.s32.totalorder %s106, %s109
      %p118 = scmp.eq.s32.totalorder %s17, 3
      %p119 = por %p117, %p118
      %p120 = scmp.ne.s32.totalorder %s109, %s110
      %p121 = scmp.eq.s32.totalorder %s17, 0
      %p122 = por %p120, %p121
      %p123 = scmp.ne.s32.totalorder %s109, %s110
      %p124 = scmp.eq.s32.totalorder %s18, 3
      %p125 = por %p123, %p124
      %p127 = scmp.ne.s32.totalorder %s110, %s126
      %p128 = scmp.eq.s32.totalorder %s18, 0
      %p129 = por %p127, %p128
      %p130 = scmp.le.s32.totalorder 1, %s12
      %p131 = scmp.lt.s32.totalorder %s12, 5
      %p132 = pnand %p130, %p131
      %p133 = pneg %p132
      // Predicated region
      $region9: #{tpu_custom_call.1} parent=5 // pred_check
        _
      $region10: #{tpu_custom_call.1} parent=5 // pred_check_branch
        %135 = sbr.rel (%p132) target = $region12
      $region11: #{tpu_custom_call.1} parent=5 // pred_region
        %s136 = ssub.s32 %s12, 1
        // Predicated region
        $region13: #{tpu_custom_call.1} parent=11 // pred_check
          %p137 = pneg %p73
        $region14: #{tpu_custom_call.1} parent=11 // pred_check_branch
          %139 = sbr.rel (%p137) target = $region16
        $region15: #{tpu_custom_call.1} parent=11 // pred_region
          _
        $region16: #{tpu_custom_call.1} parent=11 // pred_fallthru
          _
        // Predicated region
        $region17: #{tpu_custom_call.1} parent=11 // pred_check
          %p140 = pneg %p94
        $region18: #{tpu_custom_call.1} parent=11 // pred_check_branch
          %142 = sbr.rel (%p140) target = $region20
        $region19: #{tpu_custom_call.1} parent=11 // pred_region
          _
        $region20: #{tpu_custom_call.1} parent=11 // pred_fallthru
          _
      $region12: #{tpu_custom_call.1} parent=5 // pred_fallthru
        _
      %p143 = scmp.lt.s32.totalorder %s12, 4
      // Predicated region
      $region21: #{tpu_custom_call.1} parent=5 // pred_check
        %p144 = pneg %p143
      $region22: #{tpu_custom_call.1} parent=5 // pred_check_branch
        %146 = sbr.rel (%p144) target = $region24
      $region23: #{tpu_custom_call.1} parent=5 // pred_region
        // Predicated region
        $region25: #{tpu_custom_call.1} parent=23 // pred_check
          %p147 = pneg %p46
        $region26: #{tpu_custom_call.1} parent=23 // pred_check_branch
          %149 = sbr.rel (%p147) target = $region28
        $region27: #{tpu_custom_call.1} parent=23 // pred_region
          %s150 = sand.u32 %s36, 1
          %s151 = sand.u32 %s36, 1
          %s152 = smul.addr %s151, 16
          %s153 = scalar_lea.vmem [#allocation2], %s152
          %s154 = smul.addr %s20, 4
          %s155 = sadd.s32 %s19, %s154
          %s156 = smul.addr %s155, 8
          %s157 = scalar_lea.vmem %s0, %s156
          // Predicated region
          $region29: #{tpu_custom_call.1} parent=27 // pred_check
            _
          $region30: #{tpu_custom_call.1} parent=27 // pred_check_branch
            %159 = sbr.rel (0) target = $region32
          $region31: #{tpu_custom_call.1} parent=27 // pred_region
            // Predicated region
            $region33: #{tpu_custom_call.1} parent=31 // pred_check
              _
            $region34: #{tpu_custom_call.1} parent=31 // pred_check_branch
              %161 = sbr.rel (0) target = $region36
            $region35: #{tpu_custom_call.1} parent=31 // pred_region
              // Predicated region
              $region48: #{tpu_custom_call.1} parent=35 // pred_check
                _
              $region49: #{tpu_custom_call.1} parent=35 // pred_check_branch
                %179 = sbr.rel (0) target = $region51
              $region50: #{tpu_custom_call.1} parent=35 // pred_region
                loop: start=0, step=1, limit=1
                $region52: #{tpu_custom_call.1} parent=50 // loop_pre_header
                  _
                $region53: #{tpu_custom_call.1} parent=50 // loop_header
                  %s181 = sphi 0, %s185
                  %p182 = scmp.ge.s32.totalorder %s181, 1
                  %s186 = sphi %s157, %s157
                  %s187 = sphi %s153, %s153
                $region54: #{tpu_custom_call.1} parent=50 // loop_header_branch
                  %184 = sbr.rel (%p182) target = $region58
                $region55: #{tpu_custom_call.1} parent=50 // loop_body
                  %v188 = vld [vmem:[%s186] sm:$0xff]
                  %189 = vst [vmem:[%s187] sm:$0xff] %v188
                  %v190 = vld [vmem:[%s186 + $0x10] sm:$0xff]
                  %191 = vst [vmem:[%s187 + $0x8] sm:$0xff] %v190
                $region56: #{tpu_custom_call.1} parent=50 // loop_footer
                  %s185 = sadd.s32 1, %s181
                $region57: #{tpu_custom_call.1} parent=50 // loop_footer_branch
                  %180 = sbr.rel target = $region53
                $region58: #{tpu_custom_call.1} parent=50 // loop_exit
                  _
              $region51: #{tpu_custom_call.1} parent=35 // pred_fallthru
                _
              // Predicated region
              $region59: #{tpu_custom_call.1} parent=35 // pred_check
                _
              $region60: #{tpu_custom_call.1} parent=35 // pred_check_branch
                %193 = sbr.rel target = $region62
              $region61: #{tpu_custom_call.1} parent=35 // pred_region
                _
              $region62: #{tpu_custom_call.1} parent=35 // pred_fallthru
                _
            $region36: #{tpu_custom_call.1} parent=31 // pred_fallthru
              _
            // Predicated region
            $region37: #{tpu_custom_call.1} parent=31 // pred_check
              _
            $region38: #{tpu_custom_call.1} parent=31 // pred_check_branch
              %163 = sbr.rel target = $region40
            $region39: #{tpu_custom_call.1} parent=31 // pred_region
              %s165 = ssub.s32 256, 1
              loop: start=0, step=1, limit=1
              $region41: #{tpu_custom_call.1} parent=39 // loop_pre_header
                _
              $region42: #{tpu_custom_call.1} parent=39 // loop_header
                %s167 = sphi 0, %s171
                %p168 = scmp.ge.s32.totalorder %s167, 1
                %s172 = sphi %s157, %s157
                %s173 = sphi %s153, %s153
              $region43: #{tpu_custom_call.1} parent=39 // loop_header_branch
                %170 = sbr.rel (%p168) target = $region47
              $region44: #{tpu_custom_call.1} parent=39 // loop_body
                %v174 = vld [vmem:[%s172] sm:%s165]
                %175 = vst [vmem:[%s173] sm:%s165] %v174
                %v176 = vld [vmem:[%s172 + $0x10] sm:%s165]
                %177 = vst [vmem:[%s173 + $0x8] sm:%s165] %v176
              $region45: #{tpu_custom_call.1} parent=39 // loop_footer
                %s171 = sadd.s32 1, %s167
              $region46: #{tpu_custom_call.1} parent=39 // loop_footer_branch
                %166 = sbr.rel target = $region42
              $region47: #{tpu_custom_call.1} parent=39 // loop_exit
                _
            $region40: #{tpu_custom_call.1} parent=31 // pred_fallthru
              _
          $region32: #{tpu_custom_call.1} parent=27 // pred_fallthru
            _
          %194 = vnop
        $region28: #{tpu_custom_call.1} parent=23 // pred_fallthru
          _
      $region24: #{tpu_custom_call.1} parent=5 // pred_fallthru
        _
      %p195 = scmp.le.s32.totalorder 1, %s12
      %p196 = scmp.lt.s32.totalorder %s12, 5
      %p197 = pnand %p195, %p196
      %p198 = pneg %p197
      // Predicated region
      $region63: #{tpu_custom_call.1} parent=5 // pred_check
        _
      $region64: #{tpu_custom_call.1} parent=5 // pred_check_branch
        %200 = sbr.rel (%p197) target = $region66
      $region65: #{tpu_custom_call.1} parent=5 // pred_region
        %s201 = ssub.s32 %s12, 1
        %s202 = sand.u32 %s39, 1
        %s203 = sand.u32 %s39, 1
        %s204 = smul.addr %s203, 16
        %s205 = scalar_lea.vmem [#allocation2], %s204
        // Predicated region
        $region67: #{tpu_custom_call.1} parent=65 // pred_check
          %p206 = pneg %p52
        $region68: #{tpu_custom_call.1} parent=65 // pred_check_branch
          %208 = sbr.rel (%p206) target = $region70
        $region69: #{tpu_custom_call.1} parent=65 // pred_region
          _
        $region70: #{tpu_custom_call.1} parent=65 // pred_fallthru
          _
        %s209 = sand.u32 %s39, 1
        %s210 = sand.u32 %s39, 1
        %s211 = smul.addr %s210, 16
        %s212 = scalar_lea.vmem [#allocation2], %s211
        %p213 = pneg %p52
        %p214 = pneg %p49
        %p215 = pneg %p73
        %p216 = pneg %p70
        %p217 = pneg %p94
        %p218 = pneg %p91
        %p219 = pneg %p122
        %p220 = pneg %p119
        %s221 = sand.u32 %s109, 1
        %s222 = scalar_lea.sflag [#allocation4], %s221
        %s223 = sand.u32 %s109, 1
        %s224 = smul.addr %s223, 32
        %s225 = scalar_lea.vmem [#allocation3], %s224
        %v226 = vld [vmem:[%s1] sm:$0xff]
        %v227 = vld [vmem:[%s1 + $0x8] sm:$0xff]
        %v228 = vld [vmem:[%s1 + $0x10] sm:$0xff]
        %v229 = vld [vmem:[%s1 + $0x18] sm:$0xff]
        %v230 = vld [vmem:[%s205] sm:$0xff]
        %v231 = vld [vmem:[%s205 + $0x8] sm:$0x3]
        %v232 = vld [vmem:[%s2] sm:$0xff]
        %v233 = vld [vmem:[%s2 + $0x8] sm:$0xff]
        %v234 = vld [vmem:[%s2 + $0x10] sm:$0xff]
        %v235 = vld [vmem:[%s2 + $0x18] sm:$0xff]
        %237 = vset.pattern.permute.xlu0 0
        %238 = vperm.xlu0 %237, %v232
        %v239 = vpop.permute.xlu0 %238
        %242 = vset.pattern.permute.xlu0 0
        %243 = vperm.xlu0 %242, %v233
        %v244 = vpop.permute.xlu0 %243
        %247 = vset.pattern.permute.xlu0 0
        %248 = vperm.xlu0 %247, %v234
        %v249 = vpop.permute.xlu0 %248
        %252 = vset.pattern.permute.xlu0 0
        %253 = vperm.xlu0 %252, %v235
        %v254 = vpop.permute.xlu0 %253
        %vm256 = vcmask 80896
        %v258 = vsel %vm256, %v226, 0
        %v261 = vsel %vm256, %v227, 0
        %v264 = vsel %vm256, %v228, 0
        %v267 = vsel %vm256, %v229, 0
        %vm269 = vcmask 1041408
        %v271 = vsel %vm269, %v231, 0
        %273 = vmatprep.subr.mxu0 0.0
        %274 = vmatpush1.msra.mxu0 0.0
        %275 = vmatprep.subr.mxu0 0.0
        %276 = vmatpush1.msra.mxu0 0.0
        %277 = vmatprep.subr.mxu0 0.0
        %278 = vmatpush1.msra.mxu0 0.0
        %279 = vmatprep.subr.mxu0 0.0
        %280 = vmatpush1.msra.mxu0 0.0
        %281 = vmatprep.subr.mxu0 0.0
        %282 = vmatpush1.msra.mxu0 0.0
        %283 = vmatprep.subr.mxu0 0.0
        %284 = vmatpush1.msra.mxu0 0.0
        %285 = vmatprep.subr.mxu0 0.0
        %286 = vmatpush1.msra.mxu0 0.0
        %287 = vmatprep.subr.mxu0 0.0
        %288 = vmatpush1.msra.mxu0 0.0
        %289 = vmatprep.subr.mxu0 0.0
        %290 = vmatpush1.msra.mxu0 0.0
        %291 = vmatprep.subr.mxu0 0.0
        %292 = vmatpush1.msra.mxu0 0.0
        %293 = vmatprep.subr.mxu0 0.0
        %294 = vmatpush1.msra.mxu0 0.0
        %295 = vmatprep.subr.mxu0 0.0
        %296 = vmatpush1.msra.mxu0 0.0
        %297 = vmatprep.subr.mxu0 0.0
        %298 = vmatpush1.msra.mxu0 0.0
        %299 = vmatprep.subr.mxu0 0.0
        %300 = vmatpush1.msra.mxu0 0.0
        %301 = vmatprep.subr.mxu0 0.0
        %302 = vmatpush1.msra.mxu0 %v271
        %303 = vmatprep.subr.mxu0 0.0
        %304 = vmatpush1.msra.mxu0 %v230
        %305 = vmatprep.subr.mxu0 0.0
        %306 = vmatpush2.msra.mxu0 0.0
        %307 = vmatprep.subr.mxu0 0.0
        %308 = vmatpush2.msra.mxu0 0.0
        %309 = vmatprep.subr.mxu0 0.0
        %310 = vmatpush2.msra.mxu0 0.0
        %311 = vmatprep.subr.mxu0 0.0
        %312 = vmatpush2.msra.mxu0 0.0
        %313 = vmatprep.subr.mxu0 0.0
        %314 = vmatpush2.msra.mxu0 0.0
        %315 = vmatprep.subr.mxu0 0.0
        %316 = vmatpush2.msra.mxu0 0.0
        %317 = vmatprep.subr.mxu0 0.0
        %318 = vmatpush2.msra.mxu0 0.0
        %319 = vmatprep.subr.mxu0 0.0
        %320 = vmatpush2.msra.mxu0 0.0
        %321 = vmatprep.subr.mxu0 0.0
        %322 = vmatpush2.msra.mxu0 0.0
        %323 = vmatprep.subr.mxu0 0.0
        %324 = vmatpush2.msra.mxu0 0.0
        %325 = vmatprep.subr.mxu0 0.0
        %326 = vmatpush2.msra.mxu0 0.0
        %327 = vmatprep.subr.mxu0 0.0
        %328 = vmatpush2.msra.mxu0 0.0
        %329 = vmatprep.subr.mxu0 0.0
        %330 = vmatpush2.msra.mxu0 0.0
        %331 = vmatprep.subr.mxu0 0.0
        %332 = vmatpush2.msra.mxu0 0.0
        %333 = vmatprep.subr.mxu0 0.0
        %334 = vmatpush2.msra.mxu0 0.0
        %335 = vmatprep.subr.mxu0 0.0
        %336 = vmatpush2.msra.mxu0 0.0
        %337 = vmatprep.mubr.f32.mxu0 0.0
        %338 = vmatmul.mubr.f32.gmra.mxu0 %v258
        %v339 = vpop.f32.mrf.mxu0
        %v340 = vadd.f32 %v239, %v339
        %v341 = vpop.f32.mrf.mxu0
        %342 = vmatprep.mubr.f32.mxu0 0.0
        %343 = vmatmul.mubr.f32.gmra.mxu0 %v261
        %v344 = vpop.f32.mrf.mxu0
        %v345 = vadd.f32 %v244, %v344
        %v346 = vpop.f32.mrf.mxu0
        %347 = vmatprep.mubr.f32.mxu0 0.0
        %348 = vmatmul.mubr.f32.gmra.mxu0 %v264
        %v349 = vpop.f32.mrf.mxu0
        %v350 = vadd.f32 %v249, %v349
        %v351 = vpop.f32.mrf.mxu0
        %352 = vmatprep.mubr.f32.mxu0 0.0
        %353 = vmatmul.mubr.f32.gmra.mxu0 %v267
        %v354 = vpop.f32.mrf.mxu0
        %v355 = vadd.f32 %v254, %v354
        %v356 = vpop.f32.mrf.mxu0
        %357 = vdwg.mxu0
        %v358 = vmax.f32 %v340, 0.0
        %v359 = vmax.f32 %v345, 0.0
        %v360 = vmax.f32 %v350, 0.0
        %v361 = vmax.f32 %v355, 0.0
        %362 = vst [vmem:[%s225] sm:$0xff] %v358
        %363 = vst [vmem:[%s225 + $0x8] sm:$0xff] %v359
        %364 = vst [vmem:[%s225 + $0x10] sm:$0xff] %v360
        %365 = vst [vmem:[%s225 + $0x18] sm:$0xff] %v361
        %s366 = sand.u32 %s109, 1
        %s367 = scalar_lea.sflag [#allocation4], %s366
        %s368 = sand.u32 %s109, 1
        %s369 = smul.addr %s368, 32
        %s370 = scalar_lea.vmem [#allocation3], %s369
        // Predicated region
        $region71: #{tpu_custom_call.1} parent=65 // pred_check
          %p371 = pneg %p119
        $region72: #{tpu_custom_call.1} parent=65 // pred_check_branch
          %373 = sbr.rel (%p371) target = $region74
        $region73: #{tpu_custom_call.1} parent=65 // pred_region
          %s375 = ssub.s32 512, 512
          %376 = vsyncadd %s367, %s375
          %s377 = smul.addr %s22, 8
          %s378 = sadd.s32 %s21, %s377
          %s379 = smul.addr %s378, 128
          %s380 = scalar_lea.hbm %s3, %s379
          %s381 = sshll.u32 %s370, 4
          %s382 = int_to_ptr.vmem [resolvable:$true] %s381
          %387 = dma.vmem_to_hbm [thread:$0]  %s382, 512, %s380, %s367, 128, 256, 8
        $region74: #{tpu_custom_call.1} parent=65 // pred_fallthru
          _
      $region66: #{tpu_custom_call.1} parent=5 // pred_fallthru
        _
      %p388 = scmp.le.s32.totalorder 2, %s12
      // Predicated region
      $region75: #{tpu_custom_call.1} parent=5 // pred_check
        %p389 = pneg %p388
      $region76: #{tpu_custom_call.1} parent=5 // pred_check_branch
        %391 = sbr.rel (%p389) target = $region78
      $region77: #{tpu_custom_call.1} parent=5 // pred_region
        %s392 = ssub.s32 %s12, 2
        // Predicated region
        $region79: #{tpu_custom_call.1} parent=77 // pred_check
          %p393 = pneg %p125
        $region80: #{tpu_custom_call.1} parent=77 // pred_check_branch
          %395 = sbr.rel (%p393) target = $region82
        $region81: #{tpu_custom_call.1} parent=77 // pred_region
          %s396 = sand.u32 %s110, 1
          %s397 = scalar_lea.sflag [#allocation4], %s396
          %s398 = sand.u32 %s110, 1
          %s399 = smul.addr %s398, 32
          %s400 = scalar_lea.vmem [#allocation3], %s399
          %401 = dma.done %s397, 512
        $region82: #{tpu_custom_call.1} parent=77 // pred_fallthru
          _
      $region78: #{tpu_custom_call.1} parent=5 // pred_fallthru
        _
    $region6: #{tpu_custom_call.1} parent=1 // loop_footer
      %s16 = sadd.s32 1, %s12
    $region7: #{tpu_custom_call.1} parent=1 // loop_footer_branch
      %11 = sbr.rel target = $region3
    $region8: #{tpu_custom_call.1} parent=1 // loop_exit
      _
    %402 = vsyncpa [#allocation4], 1
    %s403 = scalar_lea.sflag [#allocation4], 1
    %404 = vsyncpa %s403, 1

</llo_original>
